<compile_context>
chip_gen: v7x
topology: tpu7x:2x2x1
jax: 0.10.0
libtpu: 0.0.40
codegen_flags: <defaults>
</compile_context>

<pallas_src>
import jax
import jax.numpy as jnp
from jax.experimental import pallas as pl
from jax.experimental.pallas import tpu as pltpu
from functools import partial

_LANES = 128
_TARGET_TILE_BYTES = 4 * 1024 * 1024  # ~4 MiB per VMEM buffer (per review)
_VMEM_LIMIT_BYTES = 32 * 1024 * 1024  # covers in+out double buffering everywhere


def _identity_kernel(x_ref, o_ref):
    # Pure pass-through: load the current VMEM tile and store it to the output.
    o_ref[...] = x_ref[...]


@partial(jax.jit, donate_argnums=(0,))
def prediction_module_forward(x):
    """Forward pass of the (stub) CornerNet PredictionModule.

    Args:
      x: jnp.ndarray (any shape, e.g. NCHW). The buffer is donated.
    Returns:
      jnp.ndarray, same shape/dtype as x (identity — see TODO above).
    """
    orig_shape = x.shape
    total = int(x.size)
    if total == 0:
        return x

    itemsize = jnp.dtype(x.dtype).itemsize
    sublane = max(8, 32 // itemsize)  # 8 for 4B, 16 for 2B, 32 for 1B dtypes

    # Rows of a lane-dense (rows, 128) slab, padded only up to a sublane
    # multiple (pad_amount < sublane*128 elements; zero on aligned shapes).
    rows_raw = pl.cdiv(total, _LANES)
    rows = pl.cdiv(rows_raw, sublane) * sublane
    pad_amount = rows * _LANES - total

    # Tile rows: target ~4 MiB per buffer, sublane-aligned, never exceeding rows.
    target_rows = max(sublane, _TARGET_TILE_BYTES // (_LANES * itemsize))
    target_rows = pl.cdiv(target_rows, sublane) * sublane
    tile_rows = min(rows, target_rows)

    flat = x.reshape(-1)
    if pad_amount:
        flat = jnp.pad(flat, (0, pad_amount))
    x2d = flat.reshape(rows, _LANES)

    # Ragged last block (rows % tile_rows != 0) is masked by Pallas; no need to
    # pad rows up to a tile multiple.
    grid = (pl.cdiv(rows, tile_rows),)

    out2d = pl.pallas_call(
        _identity_kernel,
        out_shape=jax.ShapeDtypeStruct((rows, _LANES), x.dtype),
        grid=grid,
        in_specs=[pl.BlockSpec((tile_rows, _LANES), lambda i: (i, 0))],
        out_specs=pl.BlockSpec((tile_rows, _LANES), lambda i: (i, 0)),
        # Identity copy: alias input 0 -> output 0. Together with jit donation
        # this lets XLA elide the extra HBM pass (no defensive copy).
        input_output_aliases={0: 0},
        compiler_params=pltpu.CompilerParams(
            dimension_semantics=("parallel",),
            vmem_limit_bytes=_VMEM_LIMIT_BYTES,
        ),
    )(x2d)

    out_flat = out2d.reshape(-1)
    if pad_amount:
        out_flat = out_flat[:total]
    return out_flat.reshape(orig_shape)


if __name__ == "__main__":
    import numpy as np

    key = jax.random.PRNGKey(0)

    # Small NCHW input consistent with a detection-head feature map
    # (flattened size is a multiple of 128 -> no padding path).
    x = jax.random.normal(key, (2, 4, 16, 16), dtype=jnp.float32)
    x_host = np.asarray(x)  # host copy BEFORE donation
    out = prediction_module_forward(x)
    out = jax.block_until_ready(out)
    assert out.shape == x_host.shape
    assert np.allclose(np.asarray(out), x_host)

    # Shape whose flattened size is NOT a multiple of 128 -> exercises the
    # ragged / small-pad path.
    key2 = jax.random.PRNGKey(1)
    y = jax.random.normal(key2, (2, 3, 7, 5), dtype=jnp.float32)
    y_host = np.asarray(y)
    out_y = jax.block_until_ready(prediction_module_forward(y))
    assert out_y.shape == y_host.shape
    assert np.allclose(np.asarray(out_y), y_host)

    print("KERNEL_OK")
</pallas_src>

<mosaic_0001>
module attributes {stable_mosaic.version = 11 : i64} {
  func.func @_identity_kernel(%arg0: i32, %arg1: memref<16x128xf32, #tpu.memory_space<vmem>>, %arg2: memref<16x128xf32, #tpu.memory_space<vmem>>) attributes {dimension_semantics = [#tpu.dimension_semantics<parallel>], iteration_bounds = array<i64: 1>, scalar_prefetch = 0 : i64, scratch_operands = 0 : i64, tpu.core_type = #tpu.core_type<tc>, window_params = [{transform_indices = @transform_0, window_bounds = array<i64: 16, 128>}, {transform_indices = @transform_1, window_bounds = array<i64: 16, 128>}]} {
    %c0 = arith.constant 0 : index
    %c0_0 = arith.constant 0 : index
    %0 = vector.load %arg1[%c0, %c0_0] : memref<16x128xf32, #tpu.memory_space<vmem>>, vector<16x128xf32>
    %c0_1 = arith.constant 0 : index
    %c0_2 = arith.constant 0 : index
    %1 = vector.load %arg2[%c0_1, %c0_2] : memref<16x128xf32, #tpu.memory_space<vmem>>, vector<16x128xf32>
    tpu.vector_store %arg2[%c0_1, %c0_2], %0 {strides = array<i32>} : memref<16x128xf32, #tpu.memory_space<vmem>>, vector<16x128xf32>,
    return
  }
  func.func @transform_0(%arg0: i32) -> (i32, i32) {
    %c0_i32 = arith.constant 0 : i32
    %c0_i32_0 = arith.constant 0 : i32
    return %arg0, %c0_i32 : i32, i32
  }
  func.func @transform_1(%arg0: i32) -> (i32, i32) {
    %c0_i32 = arith.constant 0 : i32
    %c0_i32_0 = arith.constant 0 : i32
    return %arg0, %c0_i32 : i32, i32
  }
}

</mosaic_0001>

<llo_original>
// kernel: prediction_module_forward.1
$region0: #{prediction_module_forward.1}
  #allocation0 [shape = 'u32[]', space=smem, size = 0x4, offset = 0x4, fixed_abs, tag = 'smem constant byte address 0x4 - core index']
  #allocation1 [shape = 'u32[144,128]{1,0:T(1,128)}', space=vmem, size = 0x12000, scoped, tag = 'internal scratch']
  %s0 = inlined_call_operand.vmem [shape: f32[16,128], index: 0, kind: input, shape index: {}, may-alias: {0,1}]
  %s1 = inlined_call_operand.vmem [shape: f32[16,128], index: 1, kind: output, shape index: {}, may-alias: {0,1}]
  %s2 = sld [smem:[#allocation0]]
  $region14: #{prediction_module_forward.1} parent=0
    _
  %s4 = ssub.s32 1, %s2
  %s5 = scalar_select 0, %s4, %s2
  // Predicated region
  $region2: #{prediction_module_forward.1} parent=0 // pred_check
    _
  $region3: #{prediction_module_forward.1} parent=0 // pred_check_branch
    %7 = sbr.rel (0) target = $region5
  $region4: #{prediction_module_forward.1} parent=0 // pred_region
    _
  $region5: #{prediction_module_forward.1} parent=0 // pred_fallthru
    _
  %v8 = vld [vmem:[%s0] sm:$0xff]
  %v9 = vld [vmem:[%s0 + $0x8] sm:$0xff]
  %10 = vst [vmem:[%s1] sm:$0xff] %v8
  %11 = vst [vmem:[%s1 + $0x8] sm:$0xff] %v9
  // Predicated region
  $region6: #{prediction_module_forward.1} parent=0 // pred_check
    _
  $region7: #{prediction_module_forward.1} parent=0 // pred_check_branch
    %13 = sbr.rel (0) target = $region9
  $region8: #{prediction_module_forward.1} parent=0 // pred_region
    _
  $region9: #{prediction_module_forward.1} parent=0 // pred_fallthru
    _
  // Predicated region
  $region10: #{prediction_module_forward.1} parent=0 // pred_check
    _
  $region11: #{prediction_module_forward.1} parent=0 // pred_check_branch
    %15 = sbr.rel (0) target = $region13
  $region12: #{prediction_module_forward.1} parent=0 // pred_region
    _
  $region13: #{prediction_module_forward.1} parent=0 // pred_fallthru
    _

</llo_original>
